<compile_context>
chip_gen: v7x
topology: tpu7x:2x2x1
jax: 0.10.0
libtpu: 0.0.40
codegen_flags: <defaults>
</compile_context>

<pallas_src>
import functools
import math

import numpy as np
import jax
import jax.numpy as jnp
from jax.experimental import pallas as pl
from jax.experimental.pallas import tpu as pltpu


# ---------------------------------------------------------------------------
# Kernel 1: fused 3x3 conv (stride=1, pad=1, bias=False) + folded BN (+ ReLU)
# Activation layout is (H, B, W, C); grid = (H, 3) with kh the reduction axis.
# ---------------------------------------------------------------------------
def _conv3x3_bn_kernel(a_ref, w_ref, s_ref, b_ref, o_ref, acc_ref, *,
                       relu, batch, ow):
    kh = pl.program_id(1)

    @pl.when(kh == 0)
    def _init():
        acc_ref[...] = jnp.zeros_like(acc_ref)

    # kw taps unrolled in-kernel: static shifted slices of the padded row.
    for b in range(batch):
        for kw in range(3):
            acc_ref[b] += jnp.dot(a_ref[0, b, kw:kw + ow, :], w_ref[0, kw],
                                  preferred_element_type=jnp.float32)

    @pl.when(kh == pl.num_programs(1) - 1)
    def _finalize():
        y = acc_ref[...] * s_ref[...] + b_ref[...]
        if relu:
            y = jnp.maximum(y, 0.0)
        o_ref[0] = y.astype(o_ref.dtype)


def conv3x3_bn(x_hbwc, w, bn_scale, bn_bias, *, relu):
    """x: (H, B, W, Cin); w: (3, 3, Cin, Cout).  Returns (H, B, W, Cout) bf16."""
    H, B, W, Cin = x_hbwc.shape
    Cout = w.shape[-1]
    xp = jnp.pad(x_hbwc.astype(jnp.bfloat16), ((1, 1), (0, 0), (1, 1), (0, 0)))
    wb = w.astype(jnp.bfloat16)
    scale = bn_scale.reshape(1, Cout).astype(jnp.float32)
    bias = bn_bias.reshape(1, Cout).astype(jnp.float32)

    kernel = functools.partial(_conv3x3_bn_kernel, relu=relu, batch=B, ow=W)
    return pl.pallas_call(
        kernel,
        out_shape=jax.ShapeDtypeStruct((H, B, W, Cout), jnp.bfloat16),
        grid=(H, 3),
        in_specs=[
            # kh-shifted padded input row, fetched straight from the activation.
            pl.BlockSpec((1, B, W + 2, Cin), lambda h, kh: (h + kh, 0, 0, 0)),
            pl.BlockSpec((1, 3, Cin, Cout), lambda h, kh: (kh, 0, 0, 0)),
            pl.BlockSpec((1, Cout), lambda h, kh: (0, 0)),
            pl.BlockSpec((1, Cout), lambda h, kh: (0, 0)),
        ],
        out_specs=pl.BlockSpec((1, B, W, Cout), lambda h, kh: (h, 0, 0, 0)),
        scratch_shapes=[pltpu.VMEM((B, W, Cout), jnp.float32)],
        compiler_params=pltpu.CompilerParams(
            dimension_semantics=("parallel", "arbitrary")),
    )(xp, wb, scale, bias)


# ---------------------------------------------------------------------------
# Kernel 2: squeeze-excitation style gate: sigmoid(relu(p @ W1) @ W2)
# ---------------------------------------------------------------------------
def _se_gate_kernel(p_ref, w1_ref, w2_ref, y_ref):
    h = jnp.dot(p_ref[...], w1_ref[...], preferred_element_type=jnp.float32)
    h = jnp.maximum(h, 0.0)
    y = jnp.dot(h, w2_ref[...], preferred_element_type=jnp.float32)
    y_ref[...] = jax.nn.sigmoid(y)


def se_gate(pooled, w1, w2):
    B, C = pooled.shape
    return pl.pallas_call(
        _se_gate_kernel,
        out_shape=jax.ShapeDtypeStruct((B, C), jnp.float32),
    )(pooled.astype(jnp.float32), w1.astype(jnp.float32), w2.astype(jnp.float32))


# ---------------------------------------------------------------------------
# Kernel 3: out * gate + residual, ReLU  (lane-dense last dim = W*C)
# ---------------------------------------------------------------------------
def _gate_add_relu_kernel(y_ref, g_ref, r_ref, o_ref):
    o_ref[...] = jnp.maximum(
        y_ref[...].astype(jnp.float32) * g_ref[...] +
        r_ref[...].astype(jnp.float32), 0.0)


def gate_add_relu(out2_hbwc, gate_bc, resid_hbwc):
    H, B, W, C = out2_hbwc.shape
    y = out2_hbwc.reshape(H, B, W * C)
    r = resid_hbwc.reshape(H, B, W * C)
    g = jnp.tile(gate_bc.astype(jnp.float32), (1, W))   # (B, W*C), g[b, w*C+c] = gate[b, c]
    th = 8 if H % 8 == 0 else 1
    out = pl.pallas_call(
        _gate_add_relu_kernel,
        out_shape=jax.ShapeDtypeStruct((H, B, W * C), jnp.float32),
        grid=(H // th,),
        in_specs=[
            pl.BlockSpec((th, B, W * C), lambda i: (i, 0, 0)),
            pl.BlockSpec((B, W * C), lambda i: (0, 0)),
            pl.BlockSpec((th, B, W * C), lambda i: (i, 0, 0)),
        ],
        out_specs=pl.BlockSpec((th, B, W * C), lambda i: (i, 0, 0)),
        compiler_params=pltpu.CompilerParams(dimension_semantics=("parallel",)),
    )(y, g, r)
    return out.reshape(H, B, W, C)


# ---------------------------------------------------------------------------
# Wavelet scattering transform (ScatterLayer.scattering), plain JAX.
# TODO(synk): FFT has no Pallas equivalent; the scattering transform runs as
#             plain JAX (XLA FFT) with a standard Morlet-like filter bank that
#             is not bit-exact with kymatio's Scattering2D.
# ---------------------------------------------------------------------------
def _morlet_filter_bank(size, J=2, L=3):
    w = 2.0 * np.pi * np.fft.fftfreq(size)
    wx, wy = np.meshgrid(w, w, indexing="ij")
    sigma0, xi0, slant = 0.8, 3.0 * np.pi / 4.0, 4.0 / L

    def gauss(sig):
        return np.exp(-(wx ** 2 + wy ** 2) * (sig ** 2) / 2.0)

    phi = gauss(sigma0 * (2.0 ** J))
    psis = []
    for j in range(J):
        sig = sigma0 * (2.0 ** j)
        xi = xi0 / (2.0 ** j)
        for l in range(L):
            th = np.pi * l / L
            cx, cy = xi * np.cos(th), xi * np.sin(th)
            u = (wx - cx) * np.cos(th) + (wy - cy) * np.sin(th)
            v = -(wx - cx) * np.sin(th) + (wy - cy) * np.cos(th)
            band = np.exp(-(u ** 2 + (slant * v) ** 2) * (sig ** 2) / 2.0)
            band = band - band[0, 0] * gauss(sig)          # zero DC response
            psis.append((j, jnp.asarray(band, jnp.float32)))
    return jnp.asarray(phi, jnp.float32), psis


def scattering2d(x, J=2, L=3):
    """x: (N, S, S) f32 -> (N, K, S//2^J, S//2^J), K = 1 + J*L + L*L*J*(J-1)//2."""
    N, S, _ = x.shape
    phi, psis = _morlet_filter_bank(S, J, L)
    sub = 2 ** J
    xf = jnp.fft.fft2(x)

    def lowpass(f_hat):
        y = jnp.real(jnp.fft.ifft2(f_hat * phi))
        return y[..., ::sub, ::sub]

    coeffs = [lowpass(xf)]
    first_order = []
    for j1, psi1 in psis:
        u1 = jnp.abs(jnp.fft.ifft2(xf * psi1))
        u1f = jnp.fft.fft2(u1)
        coeffs.append(lowpass(u1f))
        first_order.append((j1, u1f))
    for j1, u1f in first_order:
        for j2, psi2 in psis:
            if j2 > j1:
                u2 = jnp.abs(jnp.fft.ifft2(u1f * psi2))
                coeffs.append(lowpass(jnp.fft.fft2(u2)))
    return jnp.stack(coeffs, axis=1)


def scatter_layer(out2_hbwc, fc1_w, fc2_w):
    H, B, W, C = out2_hbwc.shape
    x_bchw = jnp.transpose(out2_hbwc.astype(jnp.float32), (1, 3, 0, 2))  # (B, C, H, W)
    s = scattering2d(x_bchw.reshape(B * C, H, W))                        # (B*C, K, H/4, W/4)
    pooled = jnp.mean(s, axis=(1, 2, 3)).reshape(B, C)                   # AdaptiveAvgPool3d(1)
    return se_gate(pooled, fc1_w, fc2_w)                                 # (B, C) sigmoid gate


# ---------------------------------------------------------------------------
# ScatterBasicBlock forward (stride=1, downsample=None) and parameter init
# ---------------------------------------------------------------------------
def scatter_basic_block_forward(params, x_nchw):
    x = jnp.transpose(x_nchw.astype(jnp.float32), (2, 0, 3, 1))          # (H, B, W, C)

    out = conv3x3_bn(x, params["conv1_w"], params["bn1_s"], params["bn1_b"], relu=True)
    out = conv3x3_bn(out, params["conv2_w"], params["bn2_s"], params["bn2_b"], relu=False)

    gate = scatter_layer(out, params["fc1_w"], params["fc2_w"])          # (B, C)

    y = gate_add_relu(out, gate, x)                                      # relu(out*g + identity)
    return jnp.transpose(y, (1, 3, 0, 2))                                # back to NCHW


def init_params(key, inplanes=64, planes=64, reduction=16):
    k1, k2, k3, k4 = jax.random.split(key, 4)

    def conv_w(rng, cin, cout):
        std = math.sqrt(2.0 / (9.0 * cout))
        return jax.random.normal(rng, (3, 3, cin, cout), jnp.float32) * std

    def bn_fold(c):
        # gamma=1, beta=0, running_mean=0, running_var=1, eps=1e-5 (eval fold).
        return (jnp.full((c,), 1.0 / math.sqrt(1.0 + 1e-5), jnp.float32),
                jnp.zeros((c,), jnp.float32))

    p = {"conv1_w": conv_w(k1, inplanes, planes),
         "conv2_w": conv_w(k2, planes, planes)}
    p["bn1_s"], p["bn1_b"] = bn_fold(planes)
    p["bn2_s"], p["bn2_b"] = bn_fold(planes)
    hid = planes // reduction
    b1, b2 = 1.0 / math.sqrt(planes), 1.0 / math.sqrt(hid)
    p["fc1_w"] = jax.random.uniform(k3, (planes, hid), jnp.float32, -b1, b1)
    p["fc2_w"] = jax.random.uniform(k4, (hid, planes), jnp.float32, -b2, b2)
    return p


if __name__ == "__main__":
    key = jax.random.PRNGKey(0)
    kp, kx = jax.random.split(key)

    # ScatterLayer hard-codes its Scattering2D shape to 56 // (channel // 64);
    # for planes=64 the block therefore operates on 56x56 feature maps.
    B, planes, H, W = 2, 64, 56, 56
    params = init_params(kp, inplanes=planes, planes=planes, reduction=16)
    x = jax.random.normal(kx, (B, planes, H, W), jnp.float32)

    fwd = jax.jit(scatter_basic_block_forward)
    y = fwd(params, x)
    jax.block_until_ready(y)

    assert y.shape == (B, planes, H, W)
    assert bool(jnp.all(jnp.isfinite(y)))
    assert bool(jnp.all(y >= 0.0))      # final ReLU
    print("KERNEL_OK")
</pallas_src>

<mosaic_0001>
module attributes {stable_mosaic.version = 11 : i64} {
  func.func @_conv3x3_bn_kernel(%arg0: i32, %arg1: i32, %arg2: memref<1x2x58x64xbf16, #tpu.memory_space<vmem>>, %arg3: memref<1x3x64x64xbf16, #tpu.memory_space<vmem>>, %arg4: memref<1x64xf32, #tpu.memory_space<vmem>>, %arg5: memref<1x64xf32, #tpu.memory_space<vmem>>, %arg6: memref<1x2x56x64xbf16, #tpu.memory_space<vmem>>, %arg7: memref<2x56x64xf32, #tpu.memory_space<vmem>>) attributes {dimension_semantics = [#tpu.dimension_semantics<parallel>, #tpu.dimension_semantics<arbitrary>], iteration_bounds = array<i64: 56, 3>, scalar_prefetch = 0 : i64, scratch_operands = 1 : i64, tpu.core_type = #tpu.core_type<tc>, window_params = [{transform_indices = @transform_0, window_bounds = array<i64: 1, 2, 58, 64>}, {transform_indices = @transform_1, window_bounds = array<i64: 1, 3, 64, 64>}, {pipeline_mode = #tpu.pipeline_mode<synchronous>, transform_indices = @transform_2, window_bounds = array<i64: 1, 64>}, {pipeline_mode = #tpu.pipeline_mode<synchronous>, transform_indices = @transform_3, window_bounds = array<i64: 1, 64>}, {transform_indices = @transform_4, window_bounds = array<i64: 1, 2, 56, 64>}]} {
    %c0_i32 = arith.constant 0 : i32
    %0 = arith.cmpi eq, %arg1, %c0_i32 : i32
    %1 = arith.extui %0 : i1 to i32
    %c0_i32_0 = arith.constant 0 : i32
    %2 = arith.cmpi ne, %1, %c0_i32_0 : i32
    scf.if %2 {
      %cst_88 = arith.constant 0.000000e+00 : f32
      %72 = vector.broadcast %cst_88 : f32 to vector<2x56x64xf32>
      %c0_89 = arith.constant 0 : index
      %c0_90 = arith.constant 0 : index
      %c0_91 = arith.constant 0 : index
      %73 = vector.load %arg7[%c0_89, %c0_90, %c0_91] : memref<2x56x64xf32, #tpu.memory_space<vmem>>, vector<2x56x64xf32>
      tpu.vector_store %arg7[%c0_89, %c0_90, %c0_91], %72 {strides = array<i32>} : memref<2x56x64xf32, #tpu.memory_space<vmem>>, vector<2x56x64xf32>,
    } else {
    }
    %c0 = arith.constant 0 : index
    %c0_1 = arith.constant 0 : index
    %c0_2 = arith.constant 0 : index
    %3 = vector.load %arg7[%c0, %c0_1, %c0_2] : memref<2x56x64xf32, #tpu.memory_space<vmem>>, vector<1x56x64xf32>
    %4 = vector.shape_cast %3 : vector<1x56x64xf32> to vector<56x64xf32>
    %c0_3 = arith.constant 0 : index
    %c0_4 = arith.constant 0 : index
    %c0_5 = arith.constant 0 : index
    %c0_6 = arith.constant 0 : index
    %5 = vector.load %arg2[%c0_3, %c0_4, %c0_5, %c0_6] : memref<1x2x58x64xbf16, #tpu.memory_space<vmem>>, vector<1x1x56x64xbf16>
    %6 = vector.shape_cast %5 : vector<1x1x56x64xbf16> to vector<56x64xbf16>
    %c0_7 = arith.constant 0 : index
    %c0_8 = arith.constant 0 : index
    %c0_9 = arith.constant 0 : index
    %c0_10 = arith.constant 0 : index
    %7 = vector.load %arg3[%c0_7, %c0_8, %c0_9, %c0_10] : memref<1x3x64x64xbf16, #tpu.memory_space<vmem>>, vector<1x1x64x64xbf16>
    %8 = vector.shape_cast %7 : vector<1x1x64x64xbf16> to vector<64x64xbf16>
    %cst = arith.constant dense<0.000000e+00> : vector<56x64xf32>
    %9 = tpu.matmul %6, %8, %cst {dimension_numbers = #tpu.dot_dimension_numbers<[1], [0], [0], [1], [0, 0, 1, 1], [], []>} : vector<56x64xbf16>, vector<64x64xbf16>, vector<56x64xf32> -> vector<56x64xf32>
    %10 = arith.addf %4, %9 : vector<56x64xf32>
    %c0_11 = arith.constant 0 : index
    %c0_12 = arith.constant 0 : index
    %c0_13 = arith.constant 0 : index
    %11 = vector.load %arg7[%c0_11, %c0_12, %c0_13] : memref<2x56x64xf32, #tpu.memory_space<vmem>>, vector<1x56x64xf32>
    %12 = vector.shape_cast %11 : vector<1x56x64xf32> to vector<56x64xf32>
    %13 = vector.shape_cast %10 : vector<56x64xf32> to vector<1x56x64xf32>
    tpu.vector_store %arg7[%c0_11, %c0_12, %c0_13], %13 {strides = array<i32>} : memref<2x56x64xf32, #tpu.memory_space<vmem>>, vector<1x56x64xf32>,
    %c0_14 = arith.constant 0 : index
    %c0_15 = arith.constant 0 : index
    %c0_16 = arith.constant 0 : index
    %14 = vector.load %arg7[%c0_14, %c0_15, %c0_16] : memref<2x56x64xf32, #tpu.memory_space<vmem>>, vector<1x56x64xf32>
    %15 = vector.shape_cast %14 : vector<1x56x64xf32> to vector<56x64xf32>
    %c0_17 = arith.constant 0 : index
    %c0_18 = arith.constant 0 : index
    %c1 = arith.constant 1 : index
    %c0_19 = arith.constant 0 : index
    %16 = vector.load %arg2[%c0_17, %c0_18, %c1, %c0_19] : memref<1x2x58x64xbf16, #tpu.memory_space<vmem>>, vector<1x1x56x64xbf16>
    %17 = vector.shape_cast %16 : vector<1x1x56x64xbf16> to vector<56x64xbf16>
    %c0_20 = arith.constant 0 : index
    %c1_21 = arith.constant 1 : index
    %c0_22 = arith.constant 0 : index
    %c0_23 = arith.constant 0 : index
    %18 = vector.load %arg3[%c0_20, %c1_21, %c0_22, %c0_23] : memref<1x3x64x64xbf16, #tpu.memory_space<vmem>>, vector<1x1x64x64xbf16>
    %19 = vector.shape_cast %18 : vector<1x1x64x64xbf16> to vector<64x64xbf16>
    %cst_24 = arith.constant dense<0.000000e+00> : vector<56x64xf32>
    %20 = tpu.matmul %17, %19, %cst_24 {dimension_numbers = #tpu.dot_dimension_numbers<[1], [0], [0], [1], [0, 0, 1, 1], [], []>} : vector<56x64xbf16>, vector<64x64xbf16>, vector<56x64xf32> -> vector<56x64xf32>
    %21 = arith.addf %15, %20 : vector<56x64xf32>
    %c0_25 = arith.constant 0 : index
    %c0_26 = arith.constant 0 : index
    %c0_27 = arith.constant 0 : index
    %22 = vector.load %arg7[%c0_25, %c0_26, %c0_27] : memref<2x56x64xf32, #tpu.memory_space<vmem>>, vector<1x56x64xf32>
    %23 = vector.shape_cast %22 : vector<1x56x64xf32> to vector<56x64xf32>
    %24 = vector.shape_cast %21 : vector<56x64xf32> to vector<1x56x64xf32>
    tpu.vector_store %arg7[%c0_25, %c0_26, %c0_27], %24 {strides = array<i32>} : memref<2x56x64xf32, #tpu.memory_space<vmem>>, vector<1x56x64xf32>,
    %c0_28 = arith.constant 0 : index
    %c0_29 = arith.constant 0 : index
    %c0_30 = arith.constant 0 : index
    %25 = vector.load %arg7[%c0_28, %c0_29, %c0_30] : memref<2x56x64xf32, #tpu.memory_space<vmem>>, vector<1x56x64xf32>
    %26 = vector.shape_cast %25 : vector<1x56x64xf32> to vector<56x64xf32>
    %c0_31 = arith.constant 0 : index
    %c0_32 = arith.constant 0 : index
    %c2 = arith.constant 2 : index
    %c0_33 = arith.constant 0 : index
    %27 = vector.load %arg2[%c0_31, %c0_32, %c2, %c0_33] : memref<1x2x58x64xbf16, #tpu.memory_space<vmem>>, vector<1x1x56x64xbf16>
    %28 = vector.shape_cast %27 : vector<1x1x56x64xbf16> to vector<56x64xbf16>
    %c0_34 = arith.constant 0 : index
    %c2_35 = arith.constant 2 : index
    %c0_36 = arith.constant 0 : index
    %c0_37 = arith.constant 0 : index
    %29 = vector.load %arg3[%c0_34, %c2_35, %c0_36, %c0_37] : memref<1x3x64x64xbf16, #tpu.memory_space<vmem>>, vector<1x1x64x64xbf16>
    %30 = vector.shape_cast %29 : vector<1x1x64x64xbf16> to vector<64x64xbf16>
    %cst_38 = arith.constant dense<0.000000e+00> : vector<56x64xf32>
    %31 = tpu.matmul %28, %30, %cst_38 {dimension_numbers = #tpu.dot_dimension_numbers<[1], [0], [0], [1], [0, 0, 1, 1], [], []>} : vector<56x64xbf16>, vector<64x64xbf16>, vector<56x64xf32> -> vector<56x64xf32>
    %32 = arith.addf %26, %31 : vector<56x64xf32>
    %c0_39 = arith.constant 0 : index
    %c0_40 = arith.constant 0 : index
    %c0_41 = arith.constant 0 : index
    %33 = vector.load %arg7[%c0_39, %c0_40, %c0_41] : memref<2x56x64xf32, #tpu.memory_space<vmem>>, vector<1x56x64xf32>
    %34 = vector.shape_cast %33 : vector<1x56x64xf32> to vector<56x64xf32>
    %35 = vector.shape_cast %32 : vector<56x64xf32> to vector<1x56x64xf32>
    tpu.vector_store %arg7[%c0_39, %c0_40, %c0_41], %35 {strides = array<i32>} : memref<2x56x64xf32, #tpu.memory_space<vmem>>, vector<1x56x64xf32>,
    %c1_42 = arith.constant 1 : index
    %c0_43 = arith.constant 0 : index
    %c0_44 = arith.constant 0 : index
    %36 = vector.load %arg7[%c1_42, %c0_43, %c0_44] : memref<2x56x64xf32, #tpu.memory_space<vmem>>, vector<1x56x64xf32>
    %37 = vector.shape_cast %36 : vector<1x56x64xf32> to vector<56x64xf32>
    %c0_45 = arith.constant 0 : index
    %c1_46 = arith.constant 1 : index
    %c0_47 = arith.constant 0 : index
    %c0_48 = arith.constant 0 : index
    %38 = vector.load %arg2[%c0_45, %c1_46, %c0_47, %c0_48] : memref<1x2x58x64xbf16, #tpu.memory_space<vmem>>, vector<1x1x56x64xbf16>
    %39 = vector.shape_cast %38 : vector<1x1x56x64xbf16> to vector<56x64xbf16>
    %c0_49 = arith.constant 0 : index
    %c0_50 = arith.constant 0 : index
    %c0_51 = arith.constant 0 : index
    %c0_52 = arith.constant 0 : index
    %40 = vector.load %arg3[%c0_49, %c0_50, %c0_51, %c0_52] : memref<1x3x64x64xbf16, #tpu.memory_space<vmem>>, vector<1x1x64x64xbf16>
    %41 = vector.shape_cast %40 : vector<1x1x64x64xbf16> to vector<64x64xbf16>
    %cst_53 = arith.constant dense<0.000000e+00> : vector<56x64xf32>
    %42 = tpu.matmul %39, %41, %cst_53 {dimension_numbers = #tpu.dot_dimension_numbers<[1], [0], [0], [1], [0, 0, 1, 1], [], []>} : vector<56x64xbf16>, vector<64x64xbf16>, vector<56x64xf32> -> vector<56x64xf32>
    %43 = arith.addf %37, %42 : vector<56x64xf32>
    %c1_54 = arith.constant 1 : index
    %c0_55 = arith.constant 0 : index
    %c0_56 = arith.constant 0 : index
    %44 = vector.load %arg7[%c1_54, %c0_55, %c0_56] : memref<2x56x64xf32, #tpu.memory_space<vmem>>, vector<1x56x64xf32>
    %45 = vector.shape_cast %44 : vector<1x56x64xf32> to vector<56x64xf32>
    %46 = vector.shape_cast %43 : vector<56x64xf32> to vector<1x56x64xf32>
    tpu.vector_store %arg7[%c1_54, %c0_55, %c0_56], %46 {strides = array<i32>} : memref<2x56x64xf32, #tpu.memory_space<vmem>>, vector<1x56x64xf32>,
    %c1_57 = arith.constant 1 : index
    %c0_58 = arith.constant 0 : index
    %c0_59 = arith.constant 0 : index
    %47 = vector.load %arg7[%c1_57, %c0_58, %c0_59] : memref<2x56x64xf32, #tpu.memory_space<vmem>>, vector<1x56x64xf32>
    %48 = vector.shape_cast %47 : vector<1x56x64xf32> to vector<56x64xf32>
    %c0_60 = arith.constant 0 : index
    %c1_61 = arith.constant 1 : index
    %c1_62 = arith.constant 1 : index
    %c0_63 = arith.constant 0 : index
    %49 = vector.load %arg2[%c0_60, %c1_61, %c1_62, %c0_63] : memref<1x2x58x64xbf16, #tpu.memory_space<vmem>>, vector<1x1x56x64xbf16>
    %50 = vector.shape_cast %49 : vector<1x1x56x64xbf16> to vector<56x64xbf16>
    %c0_64 = arith.constant 0 : index
    %c1_65 = arith.constant 1 : index
    %c0_66 = arith.constant 0 : index
    %c0_67 = arith.constant 0 : index
    %51 = vector.load %arg3[%c0_64, %c1_65, %c0_66, %c0_67] : memref<1x3x64x64xbf16, #tpu.memory_space<vmem>>, vector<1x1x64x64xbf16>
    %52 = vector.shape_cast %51 : vector<1x1x64x64xbf16> to vector<64x64xbf16>
    %cst_68 = arith.constant dense<0.000000e+00> : vector<56x64xf32>
    %53 = tpu.matmul %50, %52, %cst_68 {dimension_numbers = #tpu.dot_dimension_numbers<[1], [0], [0], [1], [0, 0, 1, 1], [], []>} : vector<56x64xbf16>, vector<64x64xbf16>, vector<56x64xf32> -> vector<56x64xf32>
    %54 = arith.addf %48, %53 : vector<56x64xf32>
    %c1_69 = arith.constant 1 : index
    %c0_70 = arith.constant 0 : index
    %c0_71 = arith.constant 0 : index
    %55 = vector.load %arg7[%c1_69, %c0_70, %c0_71] : memref<2x56x64xf32, #tpu.memory_space<vmem>>, vector<1x56x64xf32>
    %56 = vector.shape_cast %55 : vector<1x56x64xf32> to vector<56x64xf32>
    %57 = vector.shape_cast %54 : vector<56x64xf32> to vector<1x56x64xf32>
    tpu.vector_store %arg7[%c1_69, %c0_70, %c0_71], %57 {strides = array<i32>} : memref<2x56x64xf32, #tpu.memory_space<vmem>>, vector<1x56x64xf32>,
    %c1_72 = arith.constant 1 : index
    %c0_73 = arith.constant 0 : index
    %c0_74 = arith.constant 0 : index
    %58 = vector.load %arg7[%c1_72, %c0_73, %c0_74] : memref<2x56x64xf32, #tpu.memory_space<vmem>>, vector<1x56x64xf32>
    %59 = vector.shape_cast %58 : vector<1x56x64xf32> to vector<56x64xf32>
    %c0_75 = arith.constant 0 : index
    %c1_76 = arith.constant 1 : index
    %c2_77 = arith.constant 2 : index
    %c0_78 = arith.constant 0 : index
    %60 = vector.load %arg2[%c0_75, %c1_76, %c2_77, %c0_78] : memref<1x2x58x64xbf16, #tpu.memory_space<vmem>>, vector<1x1x56x64xbf16>
    %61 = vector.shape_cast %60 : vector<1x1x56x64xbf16> to vector<56x64xbf16>
    %c0_79 = arith.constant 0 : index
    %c2_80 = arith.constant 2 : index
    %c0_81 = arith.constant 0 : index
    %c0_82 = arith.constant 0 : index
    %62 = vector.load %arg3[%c0_79, %c2_80, %c0_81, %c0_82] : memref<1x3x64x64xbf16, #tpu.memory_space<vmem>>, vector<1x1x64x64xbf16>
    %63 = vector.shape_cast %62 : vector<1x1x64x64xbf16> to vector<64x64xbf16>
    %cst_83 = arith.constant dense<0.000000e+00> : vector<56x64xf32>
    %64 = tpu.matmul %61, %63, %cst_83 {dimension_numbers = #tpu.dot_dimension_numbers<[1], [0], [0], [1], [0, 0, 1, 1], [], []>} : vector<56x64xbf16>, vector<64x64xbf16>, vector<56x64xf32> -> vector<56x64xf32>
    %65 = arith.addf %59, %64 : vector<56x64xf32>
    %c1_84 = arith.constant 1 : index
    %c0_85 = arith.constant 0 : index
    %c0_86 = arith.constant 0 : index
    %66 = vector.load %arg7[%c1_84, %c0_85, %c0_86] : memref<2x56x64xf32, #tpu.memory_space<vmem>>, vector<1x56x64xf32>
    %67 = vector.shape_cast %66 : vector<1x56x64xf32> to vector<56x64xf32>
    %68 = vector.shape_cast %65 : vector<56x64xf32> to vector<1x56x64xf32>
    tpu.vector_store %arg7[%c1_84, %c0_85, %c0_86], %68 {strides = array<i32>} : memref<2x56x64xf32, #tpu.memory_space<vmem>>, vector<1x56x64xf32>,
    %c2_i32 = arith.constant 2 : i32
    %69 = arith.cmpi eq, %arg1, %c2_i32 : i32
    %70 = arith.extui %69 : i1 to i32
    %c0_i32_87 = arith.constant 0 : i32
    %71 = arith.cmpi ne, %70, %c0_i32_87 : i32
    scf.if %71 {
      %c0_88 = arith.constant 0 : index
      %c0_89 = arith.constant 0 : index
      %c0_90 = arith.constant 0 : index
      %72 = vector.load %arg7[%c0_88, %c0_89, %c0_90] : memref<2x56x64xf32, #tpu.memory_space<vmem>>, vector<2x56x64xf32>
      %c0_91 = arith.constant 0 : index
      %c0_92 = arith.constant 0 : index
      %73 = vector.load %arg4[%c0_91, %c0_92] : memref<1x64xf32, #tpu.memory_space<vmem>>, vector<1x64xf32>
      %74 = vector.shape_cast %73 : vector<1x64xf32> to vector<1x1x64xf32>
      %75 = vector.broadcast %74 : vector<1x1x64xf32> to vector<2x56x64xf32>
      %76 = arith.mulf %72, %75 : vector<2x56x64xf32>
      %c0_93 = arith.constant 0 : index
      %c0_94 = arith.constant 0 : index
      %77 = vector.load %arg5[%c0_93, %c0_94] : memref<1x64xf32, #tpu.memory_space<vmem>>, vector<1x64xf32>
      %78 = vector.shape_cast %77 : vector<1x64xf32> to vector<1x1x64xf32>
      %79 = vector.broadcast %78 : vector<1x1x64xf32> to vector<2x56x64xf32>
      %80 = arith.addf %76, %79 : vector<2x56x64xf32>
      %cst_95 = arith.constant 0.000000e+00 : f32
      %81 = vector.broadcast %cst_95 : f32 to vector<2x56x64xf32>
      %82 = arith.maximumf %80, %81 : vector<2x56x64xf32>
      %83 = arith.truncf %82 : vector<2x56x64xf32> to vector<2x56x64xbf16>
      %c0_96 = arith.constant 0 : index
      %c0_97 = arith.constant 0 : index
      %c0_98 = arith.constant 0 : index
      %c0_99 = arith.constant 0 : index
      %84 = vector.load %arg6[%c0_96, %c0_97, %c0_98, %c0_99] : memref<1x2x56x64xbf16, #tpu.memory_space<vmem>>, vector<1x2x56x64xbf16>
      %85 = vector.shape_cast %84 : vector<1x2x56x64xbf16> to vector<2x56x64xbf16>
      %86 = vector.shape_cast %83 : vector<2x56x64xbf16> to vector<1x2x56x64xbf16>
      tpu.vector_store %arg6[%c0_96, %c0_97, %c0_98, %c0_99], %86 {strides = array<i32>} : memref<1x2x56x64xbf16, #tpu.memory_space<vmem>>, vector<1x2x56x64xbf16>,
    } else {
    }
    return
  }
  func.func @transform_0(%arg0: i32, %arg1: i32) -> (i32, i32, i32, i32) {
    %0 = arith.addi %arg0, %arg1 : i32
    %c0_i32 = arith.constant 0 : i32
    %c0_i32_0 = arith.constant 0 : i32
    %c0_i32_1 = arith.constant 0 : i32
    %c0_i32_2 = arith.constant 0 : i32
    return %0, %c0_i32, %c0_i32_0, %c0_i32_1 : i32, i32, i32, i32
  }
  func.func @transform_1(%arg0: i32, %arg1: i32) -> (i32, i32, i32, i32) {
    %c0_i32 = arith.constant 0 : i32
    %c0_i32_0 = arith.constant 0 : i32
    %c0_i32_1 = arith.constant 0 : i32
    %c0_i32_2 = arith.constant 0 : i32
    return %arg1, %c0_i32, %c0_i32_0, %c0_i32_1 : i32, i32, i32, i32
  }
  func.func @transform_2(%arg0: i32, %arg1: i32) -> (i32, i32) {
    %c0_i32 = arith.constant 0 : i32
    %c0_i32_0 = arith.constant 0 : i32
    %c0_i32_1 = arith.constant 0 : i32
    return %c0_i32, %c0_i32_0 : i32, i32
  }
  func.func @transform_3(%arg0: i32, %arg1: i32) -> (i32, i32) {
    %c0_i32 = arith.constant 0 : i32
    %c0_i32_0 = arith.constant 0 : i32
    %c0_i32_1 = arith.constant 0 : i32
    return %c0_i32, %c0_i32_0 : i32, i32
  }
  func.func @transform_4(%arg0: i32, %arg1: i32) -> (i32, i32, i32, i32) {
    %c0_i32 = arith.constant 0 : i32
    %c0_i32_0 = arith.constant 0 : i32
    %c0_i32_1 = arith.constant 0 : i32
    %c0_i32_2 = arith.constant 0 : i32
    return %arg0, %c0_i32, %c0_i32_0, %c0_i32_1 : i32, i32, i32, i32
  }
}

module attributes {stable_mosaic.version = 11 : i64} {
  func.func @_conv3x3_bn_kernel(%arg0: i32, %arg1: i32, %arg2: memref<1x2x58x64xbf16, #tpu.memory_space<vmem>>, %arg3: memref<1x3x64x64xbf16, #tpu.memory_space<vmem>>, %arg4: memref<1x64xf32, #tpu.memory_space<vmem>>, %arg5: memref<1x64xf32, #tpu.memory_space<vmem>>, %arg6: memref<1x2x56x64xbf16, #tpu.memory_space<vmem>>, %arg7: memref<2x56x64xf32, #tpu.memory_space<vmem>>) attributes {dimension_semantics = [#tpu.dimension_semantics<parallel>, #tpu.dimension_semantics<arbitrary>], iteration_bounds = array<i64: 56, 3>, scalar_prefetch = 0 : i64, scratch_operands = 1 : i64, tpu.core_type = #tpu.core_type<tc>, window_params = [{transform_indices = @transform_0, window_bounds = array<i64: 1, 2, 58, 64>}, {transform_indices = @transform_1, window_bounds = array<i64: 1, 3, 64, 64>}, {pipeline_mode = #tpu.pipeline_mode<synchronous>, transform_indices = @transform_2, window_bounds = array<i64: 1, 64>}, {pipeline_mode = #tpu.pipeline_mode<synchronous>, transform_indices = @transform_3, window_bounds = array<i64: 1, 64>}, {transform_indices = @transform_4, window_bounds = array<i64: 1, 2, 56, 64>}]} {
    %c0_i32 = arith.constant 0 : i32
    %0 = arith.cmpi eq, %arg1, %c0_i32 : i32
    %1 = arith.extui %0 : i1 to i32
    %c0_i32_0 = arith.constant 0 : i32
    %2 = arith.cmpi ne, %1, %c0_i32_0 : i32
    scf.if %2 {
      %cst_88 = arith.constant 0.000000e+00 : f32
      %72 = vector.broadcast %cst_88 : f32 to vector<2x56x64xf32>
      %c0_89 = arith.constant 0 : index
      %c0_90 = arith.constant 0 : index
      %c0_91 = arith.constant 0 : index
      %73 = vector.load %arg7[%c0_89, %c0_90, %c0_91] : memref<2x56x64xf32, #tpu.memory_space<vmem>>, vector<2x56x64xf32>
      tpu.vector_store %arg7[%c0_89, %c0_90, %c0_91], %72 {strides = array<i32>} : memref<2x56x64xf32, #tpu.memory_space<vmem>>, vector<2x56x64xf32>,
    } else {
    }
    %c0 = arith.constant 0 : index
    %c0_1 = arith.constant 0 : index
    %c0_2 = arith.constant 0 : index
    %3 = vector.load %arg7[%c0, %c0_1, %c0_2] : memref<2x56x64xf32, #tpu.memory_space<vmem>>, vector<1x56x64xf32>
    %4 = vector.shape_cast %3 : vector<1x56x64xf32> to vector<56x64xf32>
    %c0_3 = arith.constant 0 : index
    %c0_4 = arith.constant 0 : index
    %c0_5 = arith.constant 0 : index
    %c0_6 = arith.constant 0 : index
    %5 = vector.load %arg2[%c0_3, %c0_4, %c0_5, %c0_6] : memref<1x2x58x64xbf16, #tpu.memory_space<vmem>>, vector<1x1x56x64xbf16>
    %6 = vector.shape_cast %5 : vector<1x1x56x64xbf16> to vector<56x64xbf16>
    %c0_7 = arith.constant 0 : index
    %c0_8 = arith.constant 0 : index
    %c0_9 = arith.constant 0 : index
    %c0_10 = arith.constant 0 : index
    %7 = vector.load %arg3[%c0_7, %c0_8, %c0_9, %c0_10] : memref<1x3x64x64xbf16, #tpu.memory_space<vmem>>, vector<1x1x64x64xbf16>
    %8 = vector.shape_cast %7 : vector<1x1x64x64xbf16> to vector<64x64xbf16>
    %cst = arith.constant dense<0.000000e+00> : vector<56x64xf32>
    %9 = tpu.matmul %6, %8, %cst {dimension_numbers = #tpu.dot_dimension_numbers<[1], [0], [0], [1], [0, 0, 1, 1], [], []>} : vector<56x64xbf16>, vector<64x64xbf16>, vector<56x64xf32> -> vector<56x64xf32>
    %10 = arith.addf %4, %9 : vector<56x64xf32>
    %c0_11 = arith.constant 0 : index
    %c0_12 = arith.constant 0 : index
    %c0_13 = arith.constant 0 : index
    %11 = vector.load %arg7[%c0_11, %c0_12, %c0_13] : memref<2x56x64xf32, #tpu.memory_space<vmem>>, vector<1x56x64xf32>
    %12 = vector.shape_cast %11 : vector<1x56x64xf32> to vector<56x64xf32>
    %13 = vector.shape_cast %10 : vector<56x64xf32> to vector<1x56x64xf32>
    tpu.vector_store %arg7[%c0_11, %c0_12, %c0_13], %13 {strides = array<i32>} : memref<2x56x64xf32, #tpu.memory_space<vmem>>, vector<1x56x64xf32>,
    %c0_14 = arith.constant 0 : index
    %c0_15 = arith.constant 0 : index
    %c0_16 = arith.constant 0 : index
    %14 = vector.load %arg7[%c0_14, %c0_15, %c0_16] : memref<2x56x64xf32, #tpu.memory_space<vmem>>, vector<1x56x64xf32>
    %15 = vector.shape_cast %14 : vector<1x56x64xf32> to vector<56x64xf32>
    %c0_17 = arith.constant 0 : index
    %c0_18 = arith.constant 0 : index
    %c1 = arith.constant 1 : index
    %c0_19 = arith.constant 0 : index
    %16 = vector.load %arg2[%c0_17, %c0_18, %c1, %c0_19] : memref<1x2x58x64xbf16, #tpu.memory_space<vmem>>, vector<1x1x56x64xbf16>
    %17 = vector.shape_cast %16 : vector<1x1x56x64xbf16> to vector<56x64xbf16>
    %c0_20 = arith.constant 0 : index
    %c1_21 = arith.constant 1 : index
    %c0_22 = arith.constant 0 : index
    %c0_23 = arith.constant 0 : index
    %18 = vector.load %arg3[%c0_20, %c1_21, %c0_22, %c0_23] : memref<1x3x64x64xbf16, #tpu.memory_space<vmem>>, vector<1x1x64x64xbf16>
    %19 = vector.shape_cast %18 : vector<1x1x64x64xbf16> to vector<64x64xbf16>
    %cst_24 = arith.constant dense<0.000000e+00> : vector<56x64xf32>
    %20 = tpu.matmul %17, %19, %cst_24 {dimension_numbers = #tpu.dot_dimension_numbers<[1], [0], [0], [1], [0, 0, 1, 1], [], []>} : vector<56x64xbf16>, vector<64x64xbf16>, vector<56x64xf32> -> vector<56x64xf32>
    %21 = arith.addf %15, %20 : vector<56x64xf32>
    %c0_25 = arith.constant 0 : index
    %c0_26 = arith.constant 0 : index
    %c0_27 = arith.constant 0 : index
    %22 = vector.load %arg7[%c0_25, %c0_26, %c0_27] : memref<2x56x64xf32, #tpu.memory_space<vmem>>, vector<1x56x64xf32>
    %23 = vector.shape_cast %22 : vector<1x56x64xf32> to vector<56x64xf32>
    %24 = vector.shape_cast %21 : vector<56x64xf32> to vector<1x56x64xf32>
    tpu.vector_store %arg7[%c0_25, %c0_26, %c0_27], %24 {strides = array<i32>} : memref<2x56x64xf32, #tpu.memory_space<vmem>>, vector<1x56x64xf32>,
    %c0_28 = arith.constant 0 : index
    %c0_29 = arith.constant 0 : index
    %c0_30 = arith.constant 0 : index
    %25 = vector.load %arg7[%c0_28, %c0_29, %c0_30] : memref<2x56x64xf32, #tpu.memory_space<vmem>>, vector<1x56x64xf32>
    %26 = vector.shape_cast %25 : vector<1x56x64xf32> to vector<56x64xf32>
    %c0_31 = arith.constant 0 : index
    %c0_32 = arith.constant 0 : index
    %c2 = arith.constant 2 : index
    %c0_33 = arith.constant 0 : index
    %27 = vector.load %arg2[%c0_31, %c0_32, %c2, %c0_33] : memref<1x2x58x64xbf16, #tpu.memory_space<vmem>>, vector<1x1x56x64xbf16>
    %28 = vector.shape_cast %27 : vector<1x1x56x64xbf16> to vector<56x64xbf16>
    %c0_34 = arith.constant 0 : index
    %c2_35 = arith.constant 2 : index
    %c0_36 = arith.constant 0 : index
    %c0_37 = arith.constant 0 : index
    %29 = vector.load %arg3[%c0_34, %c2_35, %c0_36, %c0_37] : memref<1x3x64x64xbf16, #tpu.memory_space<vmem>>, vector<1x1x64x64xbf16>
    %30 = vector.shape_cast %29 : vector<1x1x64x64xbf16> to vector<64x64xbf16>
    %cst_38 = arith.constant dense<0.000000e+00> : vector<56x64xf32>
    %31 = tpu.matmul %28, %30, %cst_38 {dimension_numbers = #tpu.dot_dimension_numbers<[1], [0], [0], [1], [0, 0, 1, 1], [], []>} : vector<56x64xbf16>, vector<64x64xbf16>, vector<56x64xf32> -> vector<56x64xf32>
    %32 = arith.addf %26, %31 : vector<56x64xf32>
    %c0_39 = arith.constant 0 : index
    %c0_40 = arith.constant 0 : index
    %c0_41 = arith.constant 0 : index
    %33 = vector.load %arg7[%c0_39, %c0_40, %c0_41] : memref<2x56x64xf32, #tpu.memory_space<vmem>>, vector<1x56x64xf32>
    %34 = vector.shape_cast %33 : vector<1x56x64xf32> to vector<56x64xf32>
    %35 = vector.shape_cast %32 : vector<56x64xf32> to vector<1x56x64xf32>
    tpu.vector_store %arg7[%c0_39, %c0_40, %c0_41], %35 {strides = array<i32>} : memref<2x56x64xf32, #tpu.memory_space<vmem>>, vector<1x56x64xf32>,
    %c1_42 = arith.constant 1 : index
    %c0_43 = arith.constant 0 : index
    %c0_44 = arith.constant 0 : index
    %36 = vector.load %arg7[%c1_42, %c0_43, %c0_44] : memref<2x56x64xf32, #tpu.memory_space<vmem>>, vector<1x56x64xf32>
    %37 = vector.shape_cast %36 : vector<1x56x64xf32> to vector<56x64xf32>
    %c0_45 = arith.constant 0 : index
    %c1_46 = arith.constant 1 : index
    %c0_47 = arith.constant 0 : index
    %c0_48 = arith.constant 0 : index
    %38 = vector.load %arg2[%c0_45, %c1_46, %c0_47, %c0_48] : memref<1x2x58x64xbf16, #tpu.memory_space<vmem>>, vector<1x1x56x64xbf16>
    %39 = vector.shape_cast %38 : vector<1x1x56x64xbf16> to vector<56x64xbf16>
    %c0_49 = arith.constant 0 : index
    %c0_50 = arith.constant 0 : index
    %c0_51 = arith.constant 0 : index
    %c0_52 = arith.constant 0 : index
    %40 = vector.load %arg3[%c0_49, %c0_50, %c0_51, %c0_52] : memref<1x3x64x64xbf16, #tpu.memory_space<vmem>>, vector<1x1x64x64xbf16>
    %41 = vector.shape_cast %40 : vector<1x1x64x64xbf16> to vector<64x64xbf16>
    %cst_53 = arith.constant dense<0.000000e+00> : vector<56x64xf32>
    %42 = tpu.matmul %39, %41, %cst_53 {dimension_numbers = #tpu.dot_dimension_numbers<[1], [0], [0], [1], [0, 0, 1, 1], [], []>} : vector<56x64xbf16>, vector<64x64xbf16>, vector<56x64xf32> -> vector<56x64xf32>
    %43 = arith.addf %37, %42 : vector<56x64xf32>
    %c1_54 = arith.constant 1 : index
    %c0_55 = arith.constant 0 : index
    %c0_56 = arith.constant 0 : index
    %44 = vector.load %arg7[%c1_54, %c0_55, %c0_56] : memref<2x56x64xf32, #tpu.memory_space<vmem>>, vector<1x56x64xf32>
    %45 = vector.shape_cast %44 : vector<1x56x64xf32> to vector<56x64xf32>
    %46 = vector.shape_cast %43 : vector<56x64xf32> to vector<1x56x64xf32>
    tpu.vector_store %arg7[%c1_54, %c0_55, %c0_56], %46 {strides = array<i32>} : memref<2x56x64xf32, #tpu.memory_space<vmem>>, vector<1x56x64xf32>,
    %c1_57 = arith.constant 1 : index
    %c0_58 = arith.constant 0 : index
    %c0_59 = arith.constant 0 : index
    %47 = vector.load %arg7[%c1_57, %c0_58, %c0_59] : memref<2x56x64xf32, #tpu.memory_space<vmem>>, vector<1x56x64xf32>
    %48 = vector.shape_cast %47 : vector<1x56x64xf32> to vector<56x64xf32>
    %c0_60 = arith.constant 0 : index
    %c1_61 = arith.constant 1 : index
    %c1_62 = arith.constant 1 : index
    %c0_63 = arith.constant 0 : index
    %49 = vector.load %arg2[%c0_60, %c1_61, %c1_62, %c0_63] : memref<1x2x58x64xbf16, #tpu.memory_space<vmem>>, vector<1x1x56x64xbf16>
    %50 = vector.shape_cast %49 : vector<1x1x56x64xbf16> to vector<56x64xbf16>
    %c0_64 = arith.constant 0 : index
    %c1_65 = arith.constant 1 : index
    %c0_66 = arith.constant 0 : index
    %c0_67 = arith.constant 0 : index
    %51 = vector.load %arg3[%c0_64, %c1_65, %c0_66, %c0_67] : memref<1x3x64x64xbf16, #tpu.memory_space<vmem>>, vector<1x1x64x64xbf16>
    %52 = vector.shape_cast %51 : vector<1x1x64x64xbf16> to vector<64x64xbf16>
    %cst_68 = arith.constant dense<0.000000e+00> : vector<56x64xf32>
    %53 = tpu.matmul %50, %52, %cst_68 {dimension_numbers = #tpu.dot_dimension_numbers<[1], [0], [0], [1], [0, 0, 1, 1], [], []>} : vector<56x64xbf16>, vector<64x64xbf16>, vector<56x64xf32> -> vector<56x64xf32>
    %54 = arith.addf %48, %53 : vector<56x64xf32>
    %c1_69 = arith.constant 1 : index
    %c0_70 = arith.constant 0 : index
    %c0_71 = arith.constant 0 : index
    %55 = vector.load %arg7[%c1_69, %c0_70, %c0_71] : memref<2x56x64xf32, #tpu.memory_space<vmem>>, vector<1x56x64xf32>
    %56 = vector.shape_cast %55 : vector<1x56x64xf32> to vector<56x64xf32>
    %57 = vector.shape_cast %54 : vector<56x64xf32> to vector<1x56x64xf32>
    tpu.vector_store %arg7[%c1_69, %c0_70, %c0_71], %57 {strides = array<i32>} : memref<2x56x64xf32, #tpu.memory_space<vmem>>, vector<1x56x64xf32>,
    %c1_72 = arith.constant 1 : index
    %c0_73 = arith.constant 0 : index
    %c0_74 = arith.constant 0 : index
    %58 = vector.load %arg7[%c1_72, %c0_73, %c0_74] : memref<2x56x64xf32, #tpu.memory_space<vmem>>, vector<1x56x64xf32>
    %59 = vector.shape_cast %58 : vector<1x56x64xf32> to vector<56x64xf32>
    %c0_75 = arith.constant 0 : index
    %c1_76 = arith.constant 1 : index
    %c2_77 = arith.constant 2 : index
    %c0_78 = arith.constant 0 : index
    %60 = vector.load %arg2[%c0_75, %c1_76, %c2_77, %c0_78] : memref<1x2x58x64xbf16, #tpu.memory_space<vmem>>, vector<1x1x56x64xbf16>
    %61 = vector.shape_cast %60 : vector<1x1x56x64xbf16> to vector<56x64xbf16>
    %c0_79 = arith.constant 0 : index
    %c2_80 = arith.constant 2 : index
    %c0_81 = arith.constant 0 : index
    %c0_82 = arith.constant 0 : index
    %62 = vector.load %arg3[%c0_79, %c2_80, %c0_81, %c0_82] : memref<1x3x64x64xbf16, #tpu.memory_space<vmem>>, vector<1x1x64x64xbf16>
    %63 = vector.shape_cast %62 : vector<1x1x64x64xbf16> to vector<64x64xbf16>
    %cst_83 = arith.constant dense<0.000000e+00> : vector<56x64xf32>
    %64 = tpu.matmul %61, %63, %cst_83 {dimension_numbers = #tpu.dot_dimension_numbers<[1], [0], [0], [1], [0, 0, 1, 1], [], []>} : vector<56x64xbf16>, vector<64x64xbf16>, vector<56x64xf32> -> vector<56x64xf32>
    %65 = arith.addf %59, %64 : vector<56x64xf32>
    %c1_84 = arith.constant 1 : index
    %c0_85 = arith.constant 0 : index
    %c0_86 = arith.constant 0 : index
    %66 = vector.load %arg7[%c1_84, %c0_85, %c0_86] : memref<2x56x64xf32, #tpu.memory_space<vmem>>, vector<1x56x64xf32>
    %67 = vector.shape_cast %66 : vector<1x56x64xf32> to vector<56x64xf32>
    %68 = vector.shape_cast %65 : vector<56x64xf32> to vector<1x56x64xf32>
    tpu.vector_store %arg7[%c1_84, %c0_85, %c0_86], %68 {strides = array<i32>} : memref<2x56x64xf32, #tpu.memory_space<vmem>>, vector<1x56x64xf32>,
    %c2_i32 = arith.constant 2 : i32
    %69 = arith.cmpi eq, %arg1, %c2_i32 : i32
    %70 = arith.extui %69 : i1 to i32
    %c0_i32_87 = arith.constant 0 : i32
    %71 = arith.cmpi ne, %70, %c0_i32_87 : i32
    scf.if %71 {
      %c0_88 = arith.constant 0 : index
      %c0_89 = arith.constant 0 : index
      %c0_90 = arith.constant 0 : index
      %72 = vector.load %arg7[%c0_88, %c0_89, %c0_90] : memref<2x56x64xf32, #tpu.memory_space<vmem>>, vector<2x56x64xf32>
      %c0_91 = arith.constant 0 : index
      %c0_92 = arith.constant 0 : index
      %73 = vector.load %arg4[%c0_91, %c0_92] : memref<1x64xf32, #tpu.memory_space<vmem>>, vector<1x64xf32>
      %74 = vector.shape_cast %73 : vector<1x64xf32> to vector<1x1x64xf32>
      %75 = vector.broadcast %74 : vector<1x1x64xf32> to vector<2x56x64xf32>
      %76 = arith.mulf %72, %75 : vector<2x56x64xf32>
      %c0_93 = arith.constant 0 : index
      %c0_94 = arith.constant 0 : index
      %77 = vector.load %arg5[%c0_93, %c0_94] : memref<1x64xf32, #tpu.memory_space<vmem>>, vector<1x64xf32>
      %78 = vector.shape_cast %77 : vector<1x64xf32> to vector<1x1x64xf32>
      %79 = vector.broadcast %78 : vector<1x1x64xf32> to vector<2x56x64xf32>
      %80 = arith.addf %76, %79 : vector<2x56x64xf32>
      %81 = arith.truncf %80 : vector<2x56x64xf32> to vector<2x56x64xbf16>
      %c0_95 = arith.constant 0 : index
      %c0_96 = arith.constant 0 : index
      %c0_97 = arith.constant 0 : index
      %c0_98 = arith.constant 0 : index
      %82 = vector.load %arg6[%c0_95, %c0_96, %c0_97, %c0_98] : memref<1x2x56x64xbf16, #tpu.memory_space<vmem>>, vector<1x2x56x64xbf16>
      %83 = vector.shape_cast %82 : vector<1x2x56x64xbf16> to vector<2x56x64xbf16>
      %84 = vector.shape_cast %81 : vector<2x56x64xbf16> to vector<1x2x56x64xbf16>
      tpu.vector_store %arg6[%c0_95, %c0_96, %c0_97, %c0_98], %84 {strides = array<i32>} : memref<1x2x56x64xbf16, #tpu.memory_space<vmem>>, vector<1x2x56x64xbf16>,
    } else {
    }
    return
  }
  func.func @transform_0(%arg0: i32, %arg1: i32) -> (i32, i32, i32, i32) {
    %0 = arith.addi %arg0, %arg1 : i32
    %c0_i32 = arith.constant 0 : i32
    %c0_i32_0 = arith.constant 0 : i32
    %c0_i32_1 = arith.constant 0 : i32
    %c0_i32_2 = arith.constant 0 : i32
    return %0, %c0_i32, %c0_i32_0, %c0_i32_1 : i32, i32, i32, i32
  }
  func.func @transform_1(%arg0: i32, %arg1: i32) -> (i32, i32, i32, i32) {
    %c0_i32 = arith.constant 0 : i32
    %c0_i32_0 = arith.constant 0 : i32
    %c0_i32_1 = arith.constant 0 : i32
    %c0_i32_2 = arith.constant 0 : i32
    return %arg1, %c0_i32, %c0_i32_0, %c0_i32_1 : i32, i32, i32, i32
  }
  func.func @transform_2(%arg0: i32, %arg1: i32) -> (i32, i32) {
    %c0_i32 = arith.constant 0 : i32
    %c0_i32_0 = arith.constant 0 : i32
    %c0_i32_1 = arith.constant 0 : i32
    return %c0_i32, %c0_i32_0 : i32, i32
  }
  func.func @transform_3(%arg0: i32, %arg1: i32) -> (i32, i32) {
    %c0_i32 = arith.constant 0 : i32
    %c0_i32_0 = arith.constant 0 : i32
    %c0_i32_1 = arith.constant 0 : i32
    return %c0_i32, %c0_i32_0 : i32, i32
  }
  func.func @transform_4(%arg0: i32, %arg1: i32) -> (i32, i32, i32, i32) {
    %c0_i32 = arith.constant 0 : i32
    %c0_i32_0 = arith.constant 0 : i32
    %c0_i32_1 = arith.constant 0 : i32
    %c0_i32_2 = arith.constant 0 : i32
    return %arg0, %c0_i32, %c0_i32_0, %c0_i32_1 : i32, i32, i32, i32
  }
}

module attributes {stable_mosaic.version = 11 : i64} {
  func.func @_se_gate_kernel(%arg0: memref<2x64xf32, #tpu.memory_space<vmem>>, %arg1: memref<64x4xf32, #tpu.memory_space<vmem>>, %arg2: memref<4x64xf32, #tpu.memory_space<vmem>>, %arg3: memref<2x64xf32, #tpu.memory_space<vmem>>) attributes {dimension_semantics = [], scalar_prefetch = 0 : i64, scratch_operands = 0 : i64, tpu.core_type = #tpu.core_type<tc>} {
    %c0 = arith.constant 0 : index
    %c0_0 = arith.constant 0 : index
    %0 = vector.load %arg0[%c0, %c0_0] : memref<2x64xf32, #tpu.memory_space<vmem>>, vector<2x64xf32>
    %c0_1 = arith.constant 0 : index
    %c0_2 = arith.constant 0 : index
    %1 = vector.load %arg1[%c0_1, %c0_2] : memref<64x4xf32, #tpu.memory_space<vmem>>, vector<64x4xf32>
    %cst = arith.constant dense<0.000000e+00> : vector<2x4xf32>
    %2 = tpu.matmul %0, %1, %cst {dimension_numbers = #tpu.dot_dimension_numbers<[1], [0], [0], [1], [0, 0, 1, 1], [], []>} : vector<2x64xf32>, vector<64x4xf32>, vector<2x4xf32> -> vector<2x4xf32>
    %cst_3 = arith.constant 0.000000e+00 : f32
    %3 = vector.broadcast %cst_3 : f32 to vector<2x4xf32>
    %4 = arith.maximumf %2, %3 : vector<2x4xf32>
    %c0_4 = arith.constant 0 : index
    %c0_5 = arith.constant 0 : index
    %5 = vector.load %arg2[%c0_4, %c0_5] : memref<4x64xf32, #tpu.memory_space<vmem>>, vector<4x64xf32>
    %cst_6 = arith.constant dense<0.000000e+00> : vector<2x64xf32>
    %6 = tpu.matmul %4, %5, %cst_6 {dimension_numbers = #tpu.dot_dimension_numbers<[1], [0], [0], [1], [0, 0, 1, 1], [], []>} : vector<2x4xf32>, vector<4x64xf32>, vector<2x64xf32> -> vector<2x64xf32>
    %7 = arith.negf %6 : vector<2x64xf32>
    %8 = math.exp %7 : vector<2x64xf32>
    %cst_7 = arith.constant 1.000000e+00 : f32
    %9 = vector.broadcast %cst_7 : f32 to vector<2x64xf32>
    %10 = arith.addf %9, %8 : vector<2x64xf32>
    %11 = arith.divf %9, %10 : vector<2x64xf32>
    %c0_8 = arith.constant 0 : index
    %c0_9 = arith.constant 0 : index
    %12 = vector.load %arg3[%c0_8, %c0_9] : memref<2x64xf32, #tpu.memory_space<vmem>>, vector<2x64xf32>
    tpu.vector_store %arg3[%c0_8, %c0_9], %11 {strides = array<i32>} : memref<2x64xf32, #tpu.memory_space<vmem>>, vector<2x64xf32>,
    return
  }
}

module attributes {stable_mosaic.version = 11 : i64} {
  func.func @_gate_add_relu_kernel(%arg0: i32, %arg1: memref<8x2x3584xbf16, #tpu.memory_space<vmem>>, %arg2: memref<2x3584xf32, #tpu.memory_space<vmem>>, %arg3: memref<8x2x3584xf32, #tpu.memory_space<vmem>>, %arg4: memref<8x2x3584xf32, #tpu.memory_space<vmem>>) attributes {dimension_semantics = [#tpu.dimension_semantics<parallel>], iteration_bounds = array<i64: 7>, scalar_prefetch = 0 : i64, scratch_operands = 0 : i64, tpu.core_type = #tpu.core_type<tc>, window_params = [{transform_indices = @transform_0, window_bounds = array<i64: 8, 2, 3584>}, {pipeline_mode = #tpu.pipeline_mode<synchronous>, transform_indices = @transform_1, window_bounds = array<i64: 2, 3584>}, {transform_indices = @transform_2, window_bounds = array<i64: 8, 2, 3584>}, {transform_indices = @transform_3, window_bounds = array<i64: 8, 2, 3584>}]} {
    %c0 = arith.constant 0 : index
    %c0_0 = arith.constant 0 : index
    %c0_1 = arith.constant 0 : index
    %0 = vector.load %arg1[%c0, %c0_0, %c0_1] : memref<8x2x3584xbf16, #tpu.memory_space<vmem>>, vector<8x2x3584xbf16>
    %1 = arith.extf %0 : vector<8x2x3584xbf16> to vector<8x2x3584xf32>
    %c0_2 = arith.constant 0 : index
    %c0_3 = arith.constant 0 : index
    %2 = vector.load %arg2[%c0_2, %c0_3] : memref<2x3584xf32, #tpu.memory_space<vmem>>, vector<2x3584xf32>
    %3 = vector.shape_cast %2 : vector<2x3584xf32> to vector<1x2x3584xf32>
    %4 = vector.broadcast %3 : vector<1x2x3584xf32> to vector<8x2x3584xf32>
    %5 = arith.mulf %1, %4 : vector<8x2x3584xf32>
    %c0_4 = arith.constant 0 : index
    %c0_5 = arith.constant 0 : index
    %c0_6 = arith.constant 0 : index
    %6 = vector.load %arg3[%c0_4, %c0_5, %c0_6] : memref<8x2x3584xf32, #tpu.memory_space<vmem>>, vector<8x2x3584xf32>
    %7 = arith.addf %5, %6 : vector<8x2x3584xf32>
    %cst = arith.constant 0.000000e+00 : f32
    %8 = vector.broadcast %cst : f32 to vector<8x2x3584xf32>
    %9 = arith.maximumf %7, %8 : vector<8x2x3584xf32>
    %c0_7 = arith.constant 0 : index
    %c0_8 = arith.constant 0 : index
    %c0_9 = arith.constant 0 : index
    %10 = vector.load %arg4[%c0_7, %c0_8, %c0_9] : memref<8x2x3584xf32, #tpu.memory_space<vmem>>, vector<8x2x3584xf32>
    tpu.vector_store %arg4[%c0_7, %c0_8, %c0_9], %9 {strides = array<i32>} : memref<8x2x3584xf32, #tpu.memory_space<vmem>>, vector<8x2x3584xf32>,
    return
  }
  func.func @transform_0(%arg0: i32) -> (i32, i32, i32) {
    %c0_i32 = arith.constant 0 : i32
    %c0_i32_0 = arith.constant 0 : i32
    %c0_i32_1 = arith.constant 0 : i32
    return %arg0, %c0_i32, %c0_i32_0 : i32, i32, i32
  }
  func.func @transform_1(%arg0: i32) -> (i32, i32) {
    %c0_i32 = arith.constant 0 : i32
    %c0_i32_0 = arith.constant 0 : i32
    %c0_i32_1 = arith.constant 0 : i32
    return %c0_i32, %c0_i32_0 : i32, i32
  }
  func.func @transform_2(%arg0: i32) -> (i32, i32, i32) {
    %c0_i32 = arith.constant 0 : i32
    %c0_i32_0 = arith.constant 0 : i32
    %c0_i32_1 = arith.constant 0 : i32
    return %arg0, %c0_i32, %c0_i32_0 : i32, i32, i32
  }
  func.func @transform_3(%arg0: i32) -> (i32, i32, i32) {
    %c0_i32 = arith.constant 0 : i32
    %c0_i32_0 = arith.constant 0 : i32
    %c0_i32_1 = arith.constant 0 : i32
    return %arg0, %c0_i32, %c0_i32_0 : i32, i32, i32
  }
}

</mosaic_0001>

<llo_original>
// kernel: tile.9
$region0: #{tile.9}
  %s0 = inlined_call_operand.vmem [shape: f32[2,56,64], index: 0, kind: input, shape index: {}]
  %s1 = inlined_call_operand.vmem [shape: f32[2,3584], index: 1, kind: output, shape index: {}]
  $region1: #{tile.9} parent=0
    #allocation0 [shape = 'u8[114688]{0}', space=vmem, size = 0x1c000, scoped, tag = 'scoped mem for output reshape']
    %v2 = vld [vmem:[%s0] ss:$2 sm:$0xff]
    %vm3 = vcmask 523264
    %4 = vst.msk [vmem:[#allocation0] ss:$8 sm:$0xf] %vm3, %v2
    %5 = vst.msk [vmem:[#allocation0] ss:$8 sm:$0xf0] %vm3, %v2
    %s6 = scalar_lea.vmem %s0, 16
    %v7 = vld [vmem:[%s6] ss:$2 sm:$0xff]
    %vm8 = vcmask 523264
    %s9 = scalar_lea.vmem [#allocation0], 64
    %10 = vst.msk [vmem:[%s9] ss:$8 sm:$0xf] %vm8, %v7
    %s11 = scalar_lea.vmem [#allocation0], 64
    %12 = vst.msk [vmem:[%s11] ss:$8 sm:$0xf0] %vm8, %v7
    %s13 = scalar_lea.vmem %s0, 32
    %v14 = vld [vmem:[%s13] ss:$2 sm:$0xff]
    %vm15 = vcmask 523264
    %s16 = scalar_lea.vmem [#allocation0], 128
    %17 = vst.msk [vmem:[%s16] ss:$8 sm:$0xf] %vm15, %v14
    %s18 = scalar_lea.vmem [#allocation0], 128
    %19 = vst.msk [vmem:[%s18] ss:$8 sm:$0xf0] %vm15, %v14
    %s20 = scalar_lea.vmem %s0, 48
    %v21 = vld [vmem:[%s20] ss:$2 sm:$0xff]
    %vm22 = vcmask 523264
    %s23 = scalar_lea.vmem [#allocation0], 192
    %24 = vst.msk [vmem:[%s23] ss:$8 sm:$0xf] %vm22, %v21
    %s25 = scalar_lea.vmem [#allocation0], 4294967265
    %26 = vst.msk [vmem:[%s25] ss:$8 sm:$0xf0] %vm22, %v21
    %s27 = scalar_lea.vmem %s0, 64
    %v28 = vld [vmem:[%s27] ss:$2 sm:$0xff]
    %vm29 = vcmask 523264
    %s30 = scalar_lea.vmem [#allocation0], 33
    %31 = vst.msk [vmem:[%s30] ss:$8 sm:$0xf] %vm29, %v28
    %s32 = scalar_lea.vmem [#allocation0], 33
    %33 = vst.msk [vmem:[%s32] ss:$8 sm:$0xf0] %vm29, %v28
    %s34 = scalar_lea.vmem %s0, 80
    %v35 = vld [vmem:[%s34] ss:$2 sm:$0xff]
    %vm36 = vcmask 523264
    %s37 = scalar_lea.vmem [#allocation0], 97
    %38 = vst.msk [vmem:[%s37] ss:$8 sm:$0xf] %vm36, %v35
    %s39 = scalar_lea.vmem [#allocation0], 97
    %40 = vst.msk [vmem:[%s39] ss:$8 sm:$0xf0] %vm36, %v35
    %s41 = scalar_lea.vmem %s0, 96
    %v42 = vld [vmem:[%s41] ss:$2 sm:$0xff]
    %vm43 = vcmask 523264
    %s44 = scalar_lea.vmem [#allocation0], 161
    %45 = vst.msk [vmem:[%s44] ss:$8 sm:$0xf] %vm43, %v42
    %s46 = scalar_lea.vmem [#allocation0], 161
    %47 = vst.msk [vmem:[%s46] ss:$8 sm:$0xf0] %vm43, %v42
    %s48 = scalar_lea.vmem %s0, 1
    %s49 = smov 3
    %v50 = vld [vmem:[%s48] ss:$56 sm:%s49]
    %s51 = scalar_lea.vmem %s0, 4294967187
    %s52 = smov 12
    %v53 = vld [vmem:[%s51] ss:$56 sm:%s52]
    %vm54 = vcmask 1043458
    %v55 = vsel %vm54, %v53, %v50
    %s56 = scalar_lea.vmem %s0, 4294967077
    %s57 = smov 48
    %v58 = vld [vmem:[%s56] ss:$56 sm:%s57]
    %vm59 = vcmask 1045508
    %v60 = vsel %vm59, %v58, %v55
    %s61 = scalar_lea.vmem %s0, 4294966967
    %s62 = smov 192
    %v63 = vld [vmem:[%s61] ss:$56 sm:%s62]
    %vm64 = vcmask 1047558
    %v65 = vsel %vm64, %v63, %v60
    %66 = vrot.lane.b32.xlu0 %v65, 64
    %v67 = vpop.permute.xlu0 %66
    %vm68 = vcmask 1048064
    %69 = vst.msk [vmem:[#allocation0] sm:$0x3] %vm68, %v67
    %s70 = scalar_lea.vmem [#allocation0], 6
    %71 = vst.msk [vmem:[%s70] sm:$0xc] %vm68, %v67
    %s72 = scalar_lea.vmem [#allocation0], 12
    %73 = vst.msk [vmem:[%s72] sm:$0x30] %vm68, %v67
    %s74 = scalar_lea.vmem [#allocation0], 18
    %75 = vst.msk [vmem:[%s74] sm:$0xc0] %vm68, %v67
    %s76 = scalar_lea.vmem %s0, 9
    %s77 = smov 3
    %v78 = vld [vmem:[%s76] ss:$56 sm:%s77]
    %s79 = scalar_lea.vmem %s0, 4294967195
    %s80 = smov 12
    %v81 = vld [vmem:[%s79] ss:$56 sm:%s80]
    %vm82 = vcmask 1043458
    %v83 = vsel %vm82, %v81, %v78
    %s84 = scalar_lea.vmem %s0, 4294967085
    %s85 = smov 48
    %v86 = vld [vmem:[%s84] ss:$56 sm:%s85]
    %vm87 = vcmask 1045508
    %v88 = vsel %vm87, %v86, %v83
    %s89 = scalar_lea.vmem %s0, 4294966975
    %s90 = smov 192
    %v91 = vld [vmem:[%s89] ss:$56 sm:%s90]
    %vm92 = vcmask 1047558
    %v93 = vsel %vm92, %v91, %v88
    %94 = vrot.lane.b32.xlu0 %v93, 64
    %v95 = vpop.permute.xlu0 %94
    %vm96 = vcmask 1048064
    %s97 = scalar_lea.vmem [#allocation0], 32
    %98 = vst.msk [vmem:[%s97] sm:$0x3] %vm96, %v95
    %s99 = scalar_lea.vmem [#allocation0], 38
    %100 = vst.msk [vmem:[%s99] sm:$0xc] %vm96, %v95
    %s101 = scalar_lea.vmem [#allocation0], 44
    %102 = vst.msk [vmem:[%s101] sm:$0x30] %vm96, %v95
    %s103 = scalar_lea.vmem [#allocation0], 50
    %104 = vst.msk [vmem:[%s103] sm:$0xc0] %vm96, %v95
    %s105 = scalar_lea.vmem %s0, 17
    %s106 = smov 3
    %v107 = vld [vmem:[%s105] ss:$56 sm:%s106]
    %s108 = scalar_lea.vmem %s0, 4294967203
    %s109 = smov 12
    %v110 = vld [vmem:[%s108] ss:$56 sm:%s109]
    %vm111 = vcmask 1043458
    %v112 = vsel %vm111, %v110, %v107
    %s113 = scalar_lea.vmem %s0, 4294967093
    %s114 = smov 48
    %v115 = vld [vmem:[%s113] ss:$56 sm:%s114]
    %vm116 = vcmask 1045508
    %v117 = vsel %vm116, %v115, %v112
    %s118 = scalar_lea.vmem %s0, 4294966983
    %s119 = smov 192
    %v120 = vld [vmem:[%s118] ss:$56 sm:%s119]
    %vm121 = vcmask 1047558
    %v122 = vsel %vm121, %v120, %v117
    %123 = vrot.lane.b32.xlu0 %v122, 64
    %v124 = vpop.permute.xlu0 %123
    %vm125 = vcmask 1048064
    %s126 = scalar_lea.vmem [#allocation0], 64
    %127 = vst.msk [vmem:[%s126] sm:$0x3] %vm125, %v124
    %s128 = scalar_lea.vmem [#allocation0], 70
    %129 = vst.msk [vmem:[%s128] sm:$0xc] %vm125, %v124
    %s130 = scalar_lea.vmem [#allocation0], 76
    %131 = vst.msk [vmem:[%s130] sm:$0x30] %vm125, %v124
    %s132 = scalar_lea.vmem [#allocation0], 82
    %133 = vst.msk [vmem:[%s132] sm:$0xc0] %vm125, %v124
    %s134 = scalar_lea.vmem %s0, 25
    %s135 = smov 3
    %v136 = vld [vmem:[%s134] ss:$56 sm:%s135]
    %s137 = scalar_lea.vmem %s0, 4294967211
    %s138 = smov 12
    %v139 = vld [vmem:[%s137] ss:$56 sm:%s138]
    %vm140 = vcmask 1043458
    %v141 = vsel %vm140, %v139, %v136
    %s142 = scalar_lea.vmem %s0, 4294967101
    %s143 = smov 48
    %v144 = vld [vmem:[%s142] ss:$56 sm:%s143]
    %vm145 = vcmask 1045508
    %v146 = vsel %vm145, %v144, %v141
    %s147 = scalar_lea.vmem %s0, 4294966991
    %s148 = smov 192
    %v149 = vld [vmem:[%s147] ss:$56 sm:%s148]
    %vm150 = vcmask 1047558
    %v151 = vsel %vm150, %v149, %v146
    %152 = vrot.lane.b32.xlu0 %v151, 64
    %v153 = vpop.permute.xlu0 %152
    %vm154 = vcmask 1048064
    %s155 = scalar_lea.vmem [#allocation0], 96
    %156 = vst.msk [vmem:[%s155] sm:$0x3] %vm154, %v153
    %s157 = scalar_lea.vmem [#allocation0], 102
    %158 = vst.msk [vmem:[%s157] sm:$0xc] %vm154, %v153
    %s159 = scalar_lea.vmem [#allocation0], 108
    %160 = vst.msk [vmem:[%s159] sm:$0x30] %vm154, %v153
    %s161 = scalar_lea.vmem [#allocation0], 114
    %162 = vst.msk [vmem:[%s161] sm:$0xc0] %vm154, %v153
    %s163 = scalar_lea.vmem %s0, 33
    %s164 = smov 3
    %v165 = vld [vmem:[%s163] ss:$56 sm:%s164]
    %s166 = scalar_lea.vmem %s0, 4294967219
    %s167 = smov 12
    %v168 = vld [vmem:[%s166] ss:$56 sm:%s167]
    %vm169 = vcmask 1043458
    %v170 = vsel %vm169, %v168, %v165
    %s171 = scalar_lea.vmem %s0, 4294967109
    %s172 = smov 48
    %v173 = vld [vmem:[%s171] ss:$56 sm:%s172]
    %vm174 = vcmask 1045508
    %v175 = vsel %vm174, %v173, %v170
    %s176 = scalar_lea.vmem %s0, 4294966999
    %s177 = smov 192
    %v178 = vld [vmem:[%s176] ss:$56 sm:%s177]
    %vm179 = vcmask 1047558
    %v180 = vsel %vm179, %v178, %v175
    %181 = vrot.lane.b32.xlu0 %v180, 64
    %v182 = vpop.permute.xlu0 %181
    %vm183 = vcmask 1048064
    %s184 = scalar_lea.vmem [#allocation0], 128
    %185 = vst.msk [vmem:[%s184] sm:$0x3] %vm183, %v182
    %s186 = scalar_lea.vmem [#allocation0], 134
    %187 = vst.msk [vmem:[%s186] sm:$0xc] %vm183, %v182
    %s188 = scalar_lea.vmem [#allocation0], 140
    %189 = vst.msk [vmem:[%s188] sm:$0x30] %vm183, %v182
    %s190 = scalar_lea.vmem [#allocation0], 146
    %191 = vst.msk [vmem:[%s190] sm:$0xc0] %vm183, %v182
    %s192 = scalar_lea.vmem %s0, 41
    %s193 = smov 3
    %v194 = vld [vmem:[%s192] ss:$56 sm:%s193]
    %s195 = scalar_lea.vmem %s0, 4294967227
    %s196 = smov 12
    %v197 = vld [vmem:[%s195] ss:$56 sm:%s196]
    %vm198 = vcmask 1043458
    %v199 = vsel %vm198, %v197, %v194
    %s200 = scalar_lea.vmem %s0, 4294967117
    %s201 = smov 48
    %v202 = vld [vmem:[%s200] ss:$56 sm:%s201]
    %vm203 = vcmask 1045508
    %v204 = vsel %vm203, %v202, %v199
    %s205 = scalar_lea.vmem %s0, 4294967007
    %s206 = smov 192
    %v207 = vld [vmem:[%s205] ss:$56 sm:%s206]
    %vm208 = vcmask 1047558
    %v209 = vsel %vm208, %v207, %v204
    %210 = vrot.lane.b32.xlu0 %v209, 64
    %v211 = vpop.permute.xlu0 %210
    %vm212 = vcmask 1048064
    %s213 = scalar_lea.vmem [#allocation0], 160
    %214 = vst.msk [vmem:[%s213] sm:$0x3] %vm212, %v211
    %s215 = scalar_lea.vmem [#allocation0], 166
    %216 = vst.msk [vmem:[%s215] sm:$0xc] %vm212, %v211
    %s217 = scalar_lea.vmem [#allocation0], 172
    %218 = vst.msk [vmem:[%s217] sm:$0x30] %vm212, %v211
    %s219 = scalar_lea.vmem [#allocation0], 178
    %220 = vst.msk [vmem:[%s219] sm:$0xc0] %vm212, %v211
    %s221 = scalar_lea.vmem %s0, 49
    %s222 = smov 3
    %v223 = vld [vmem:[%s221] ss:$56 sm:%s222]
    %s224 = scalar_lea.vmem %s0, 4294967235
    %s225 = smov 12
    %v226 = vld [vmem:[%s224] ss:$56 sm:%s225]
    %vm227 = vcmask 1043458
    %v228 = vsel %vm227, %v226, %v223
    %s229 = scalar_lea.vmem %s0, 4294967125
    %s230 = smov 48
    %v231 = vld [vmem:[%s229] ss:$56 sm:%s230]
    %vm232 = vcmask 1045508
    %v233 = vsel %vm232, %v231, %v228
    %s234 = scalar_lea.vmem %s0, 4294967015
    %s235 = smov 192
    %v236 = vld [vmem:[%s234] ss:$56 sm:%s235]
    %vm237 = vcmask 1047558
    %v238 = vsel %vm237, %v236, %v233
    %239 = vrot.lane.b32.xlu0 %v238, 64
    %v240 = vpop.permute.xlu0 %239
    %vm241 = vcmask 1048064
    %s242 = scalar_lea.vmem [#allocation0], 192
    %243 = vst.msk [vmem:[%s242] sm:$0x3] %vm241, %v240
    %s244 = scalar_lea.vmem [#allocation0], 198
    %245 = vst.msk [vmem:[%s244] sm:$0xc] %vm241, %v240
    %s246 = scalar_lea.vmem [#allocation0], 204
    %247 = vst.msk [vmem:[%s246] sm:$0x30] %vm241, %v240
    %s248 = scalar_lea.vmem [#allocation0], 210
    %249 = vst.msk [vmem:[%s248] sm:$0xc0] %vm241, %v240
    %s251 = sshllo.u32 0, 2
    %v253 = vld [vmem:[#allocation0] sm:%s251]
    %s254 = sshllo.u32 0, 2
    %255 = vst [vmem:[%s1] sm:%s254] %v253
    %s256 = scalar_lea.vmem [#allocation0], 8
    %v257 = vld [vmem:[%s256] sm:%s251]
    %s258 = sshllo.u32 0, 2
    %s259 = scalar_lea.vmem %s1, 2
    %260 = vst [vmem:[%s259] sm:%s258] %v257
    %s261 = scalar_lea.vmem [#allocation0], 16
    %v262 = vld [vmem:[%s261] sm:%s251]
    %s263 = sshllo.u32 0, 2
    %s264 = smul.addr 2, 2
    %s265 = scalar_lea.vmem %s1, %s264
    %266 = vst [vmem:[%s265] sm:%s263] %v262
    %s267 = scalar_lea.vmem [#allocation0], 24
    %v268 = vld [vmem:[%s267] sm:%s251]
    %s269 = sshllo.u32 0, 2
    %s270 = smul.addr 2, 3
    %s271 = scalar_lea.vmem %s1, %s270
    %272 = vst [vmem:[%s271] sm:%s269] %v268
    %s273 = scalar_lea.vmem [#allocation0], 32
    %v274 = vld [vmem:[%s273] sm:%s251]
    %s275 = sshllo.u32 0, 2
    %s276 = smul.addr 2, 4
    %s277 = scalar_lea.vmem %s1, %s276
    %278 = vst [vmem:[%s277] sm:%s275] %v274
    %s279 = scalar_lea.vmem [#allocation0], 40
    %v280 = vld [vmem:[%s279] sm:%s251]
    %s281 = sshllo.u32 0, 2
    %s282 = smul.addr 2, 5
    %s283 = scalar_lea.vmem %s1, %s282
    %284 = vst [vmem:[%s283] sm:%s281] %v280
    %s285 = scalar_lea.vmem [#allocation0], 48
    %v286 = vld [vmem:[%s285] sm:%s251]
    %s287 = sshllo.u32 0, 2
    %s288 = smul.addr 2, 6
    %s289 = scalar_lea.vmem %s1, %s288
    %290 = vst [vmem:[%s289] sm:%s287] %v286
    %s291 = scalar_lea.vmem [#allocation0], 56
    %v292 = vld [vmem:[%s291] sm:%s251]
    %s293 = sshllo.u32 0, 2
    %s294 = smul.addr 2, 7
    %s295 = scalar_lea.vmem %s1, %s294
    %296 = vst [vmem:[%s295] sm:%s293] %v292
    %s297 = scalar_lea.vmem [#allocation0], 64
    %v298 = vld [vmem:[%s297] sm:%s251]
    %s299 = sshllo.u32 0, 2
    %s300 = smul.addr 2, 8
    %s301 = scalar_lea.vmem %s1, %s300
    %302 = vst [vmem:[%s301] sm:%s299] %v298
    %s303 = scalar_lea.vmem [#allocation0], 72
    %v304 = vld [vmem:[%s303] sm:%s251]
    %s305 = sshllo.u32 0, 2
    %s306 = smul.addr 2, 9
    %s307 = scalar_lea.vmem %s1, %s306
    %308 = vst [vmem:[%s307] sm:%s305] %v304
    %s309 = scalar_lea.vmem [#allocation0], 80
    %v310 = vld [vmem:[%s309] sm:%s251]
    %s311 = sshllo.u32 0, 2
    %s312 = smul.addr 2, 10
    %s313 = scalar_lea.vmem %s1, %s312
    %314 = vst [vmem:[%s313] sm:%s311] %v310
    %s315 = scalar_lea.vmem [#allocation0], 88
    %v316 = vld [vmem:[%s315] sm:%s251]
    %s317 = sshllo.u32 0, 2
    %s318 = smul.addr 2, 11
    %s319 = scalar_lea.vmem %s1, %s318
    %320 = vst [vmem:[%s319] sm:%s317] %v316
    %s321 = scalar_lea.vmem [#allocation0], 96
    %v322 = vld [vmem:[%s321] sm:%s251]
    %s323 = sshllo.u32 0, 2
    %s324 = smul.addr 2, 12
    %s325 = scalar_lea.vmem %s1, %s324
    %326 = vst [vmem:[%s325] sm:%s323] %v322
    %s327 = scalar_lea.vmem [#allocation0], 104
    %v328 = vld [vmem:[%s327] sm:%s251]
    %s329 = sshllo.u32 0, 2
    %s330 = smul.addr 2, 13
    %s331 = scalar_lea.vmem %s1, %s330
    %332 = vst [vmem:[%s331] sm:%s329] %v328
    %s333 = scalar_lea.vmem [#allocation0], 112
    %v334 = vld [vmem:[%s333] sm:%s251]
    %s335 = sshllo.u32 0, 2
    %s336 = smul.addr 2, 14
    %s337 = scalar_lea.vmem %s1, %s336
    %338 = vst [vmem:[%s337] sm:%s335] %v334
    %s339 = scalar_lea.vmem [#allocation0], 120
    %v340 = vld [vmem:[%s339] sm:%s251]
    %s341 = sshllo.u32 0, 2
    %s342 = smul.addr 2, 15
    %s343 = scalar_lea.vmem %s1, %s342
    %344 = vst [vmem:[%s343] sm:%s341] %v340
    %s345 = scalar_lea.vmem [#allocation0], 128
    %v346 = vld [vmem:[%s345] sm:%s251]
    %s347 = sshllo.u32 0, 2
    %s348 = smul.addr 2, 16
    %s349 = scalar_lea.vmem %s1, %s348
    %350 = vst [vmem:[%s349] sm:%s347] %v346
    %s351 = scalar_lea.vmem [#allocation0], 136
    %v352 = vld [vmem:[%s351] sm:%s251]
    %s353 = sshllo.u32 0, 2
    %s354 = smul.addr 2, 17
    %s355 = scalar_lea.vmem %s1, %s354
    %356 = vst [vmem:[%s355] sm:%s353] %v352
    %s357 = scalar_lea.vmem [#allocation0], 144
    %v358 = vld [vmem:[%s357] sm:%s251]
    %s359 = sshllo.u32 0, 2
    %s360 = smul.addr 2, 18
    %s361 = scalar_lea.vmem %s1, %s360
    %362 = vst [vmem:[%s361] sm:%s359] %v358
    %s363 = scalar_lea.vmem [#allocation0], 152
    %v364 = vld [vmem:[%s363] sm:%s251]
    %s365 = sshllo.u32 0, 2
    %s366 = smul.addr 2, 19
    %s367 = scalar_lea.vmem %s1, %s366
    %368 = vst [vmem:[%s367] sm:%s365] %v364
    %s369 = scalar_lea.vmem [#allocation0], 160
    %v370 = vld [vmem:[%s369] sm:%s251]
    %s371 = sshllo.u32 0, 2
    %s372 = smul.addr 2, 20
    %s373 = scalar_lea.vmem %s1, %s372
    %374 = vst [vmem:[%s373] sm:%s371] %v370
    %s375 = scalar_lea.vmem [#allocation0], 168
    %v376 = vld [vmem:[%s375] sm:%s251]
    %s377 = sshllo.u32 0, 2
    %s378 = smul.addr 2, 21
    %s379 = scalar_lea.vmem %s1, %s378
    %380 = vst [vmem:[%s379] sm:%s377] %v376
    %s381 = scalar_lea.vmem [#allocation0], 176
    %v382 = vld [vmem:[%s381] sm:%s251]
    %s383 = sshllo.u32 0, 2
    %s384 = smul.addr 2, 22
    %s385 = scalar_lea.vmem %s1, %s384
    %386 = vst [vmem:[%s385] sm:%s383] %v382
    %s387 = scalar_lea.vmem [#allocation0], 184
    %v388 = vld [vmem:[%s387] sm:%s251]
    %s389 = sshllo.u32 0, 2
    %s390 = smul.addr 2, 23
    %s391 = scalar_lea.vmem %s1, %s390
    %392 = vst [vmem:[%s391] sm:%s389] %v388
    %s393 = scalar_lea.vmem [#allocation0], 192
    %v394 = vld [vmem:[%s393] sm:%s251]
    %s395 = sshllo.u32 0, 2
    %s396 = smul.addr 2, 24
    %s397 = scalar_lea.vmem %s1, %s396
    %398 = vst [vmem:[%s397] sm:%s395] %v394
    %s399 = scalar_lea.vmem [#allocation0], 200
    %v400 = vld [vmem:[%s399] sm:%s251]
    %s401 = sshllo.u32 0, 2
    %s402 = smul.addr 2, 25
    %s403 = scalar_lea.vmem %s1, %s402
    %404 = vst [vmem:[%s403] sm:%s401] %v400
    %s405 = scalar_lea.vmem [#allocation0], 208
    %v406 = vld [vmem:[%s405] sm:%s251]
    %s407 = sshllo.u32 0, 2
    %s408 = smul.addr 2, 26
    %s409 = scalar_lea.vmem %s1, %s408
    %410 = vst [vmem:[%s409] sm:%s407] %v406
    %s411 = scalar_lea.vmem [#allocation0], 216
    %v412 = vld [vmem:[%s411] sm:%s251]
    %s413 = sshllo.u32 0, 2
    %s414 = smul.addr 2, 27
    %s415 = scalar_lea.vmem %s1, %s414
    %416 = vst [vmem:[%s415] sm:%s413] %v412

</llo_original>
